<compile_context>
chip_gen: v7x
topology: tpu7x:2x2x1
jax: 0.10.0
libtpu: 0.0.40
codegen_flags: <defaults>
</compile_context>

<pallas_src>
import functools

import numpy as np
import jax
import jax.numpy as jnp
from jax.experimental import pallas as pl
from jax.experimental.pallas import tpu as pltpu


def _round_up(x, m):
    return ((x + m - 1) // m) * m


def _cdiv(a, b):
    return (a + b - 1) // b


@functools.lru_cache(maxsize=None)
def _vmem_budget_bytes():
    cap = 64 * 1024 * 1024  # conservative fallback (v7x-sized VMEM)
    try:
        cap = int(pltpu.get_tpu_info().vmem_capacity_bytes)
    except Exception:
        pass
    # <= 32 MiB limit on v7x (64 MiB/TC), 64 MiB on v5e/v6e (128 MiB): headroom.
    return min(cap // 2, 64 * 1024 * 1024)


def _pick_tb(B, cap_rows, sub, tb_max=1024):
    tb = max(sub, min(tb_max, int(cap_rows)))
    tb = max(sub, (tb // sub) * sub)
    if B > sub:  # keep >= 2 batch tiles when B allows (v7x has 2 TensorCores)
        tb = min(tb, _round_up(_cdiv(B, 2), sub))
    return min(tb, _round_up(B, sub))


@functools.lru_cache(maxsize=None)
def _plan(B, IN, UNIT, stream_bytes, force_k_tiled, tk_max):
    budget = _vmem_budget_bytes()
    usable = int(budget * 0.85)          # leave headroom for internal scratch
    UNIT_P = _round_up(UNIT, 128)        # lane-dense (unmasked) output stores
    sub = 16 if stream_bytes == 2 else 8  # bf16 sublane packing wants x16

    # --- single-pass (K collapsed): W resident in VMEM, x streamed (tb, IN) ---
    w_bytes = 2 * IN * UNIT_P * stream_bytes           # assume double-buffered
    row_bytes = 2 * (IN * stream_bytes + UNIT_P * 4)   # x + f32 out, dbl-buffered
    if (not force_k_tiled) and (w_bytes + sub * row_bytes <= usable):
        tb = _pick_tb(B, (usable - w_bytes) // row_bytes, sub)
        return ("single", tb, IN, 1, IN, UNIT_P, budget)

    # --- K-tiled fallback (very large IN): minimize zero-pad overshoot of IN ---
    IN_128 = _round_up(IN, 128)
    tk_cap = _round_up(min(tk_max, IN_128), 128)
    nk_lo = _cdiv(IN_128, tk_cap)
    best = None
    for nk in range(nk_lo, min(nk_lo + 16, _cdiv(IN_128, 128)) + 1):
        tk = _round_up(_cdiv(IN_128, nk), 128)
        waste = tk * nk - IN_128
        if best is None or waste < best[0]:
            best = (waste, tk, nk)
        if waste == 0:
            break
    _, tk, nk = best
    IN_P = tk * nk
    w_blk_bytes = 2 * tk * UNIT_P * stream_bytes
    row_bytes = 2 * (tk * stream_bytes + UNIT_P * 4)
    tb = _pick_tb(B, max(0, usable - w_blk_bytes) // row_bytes, sub)
    return ("ktiled", tb, tk, nk, IN_P, UNIT_P, budget)


def _me_single_kernel(x_ref, w_ref, b_ref, o_ref):
    # x_ref: (tb, IN) stream dtype; w_ref: (IN, UNIT_P); b_ref: (1, UNIT_P) f32.
    y = jnp.dot(x_ref[...], w_ref[...], preferred_element_type=jnp.float32)
    y = y + b_ref[...]
    # torch normalize: y / max(||y||, 1e-12) == y * rsqrt(max(||y||^2, 1e-24))
    sq = jnp.sum(y * y, axis=1, keepdims=True)
    inv = jax.lax.rsqrt(jnp.maximum(sq, 1e-24))
    o_ref[...] = (y * inv).astype(o_ref.dtype)


def _me_ktiled_kernel(x_ref, w_ref, b_ref, o_ref):
    # Accumulate directly into the resident f32 output block (no VMEM scratch).
    k = pl.program_id(1)

    @pl.when(k == 0)
    def _():
        o_ref[...] = jnp.zeros_like(o_ref)

    o_ref[...] += jnp.dot(x_ref[...], w_ref[...],
                          preferred_element_type=jnp.float32)

    @pl.when(k == pl.num_programs(1) - 1)
    def _():
        y = o_ref[...] + b_ref[...]
        sq = jnp.sum(y * y, axis=1, keepdims=True)
        inv = jax.lax.rsqrt(jnp.maximum(sq, 1e-24))
        o_ref[...] = (y * inv).astype(o_ref.dtype)


@functools.partial(
    jax.jit,
    static_argnames=("stream_dtype", "mode", "tb", "tk", "nk", "in_p",
                     "unit_p", "vmem_limit"),
)
def _metric_embedding_impl(x, w_t, b, *, stream_dtype, mode, tb, tk, nk,
                           in_p, unit_p, vmem_limit):
    B, IN = x.shape
    UNIT = w_t.shape[1]
    sb = np.dtype(stream_dtype).itemsize

    # Casts are no-ops for f32 streaming; for bf16 the x cast fuses with the
    # producing layer in a full-model jit.
    x_s = x.astype(stream_dtype)
    w_s = w_t.astype(stream_dtype)
    if (in_p, unit_p) != (IN, UNIT):
        # Only the (small) weight is padded; zero rows/cols are exact no-ops.
        w_s = jnp.pad(w_s, ((0, in_p - IN), (0, unit_p - UNIT)))
    if in_p != IN:
        # Only in the K-tiled fallback: the reduction axis must be zero-padded.
        x_s = jnp.pad(x_s, ((0, 0), (0, in_p - IN)))
    b_p = b.astype(jnp.float32).reshape(1, UNIT)
    if unit_p != UNIT:
        b_p = jnp.pad(b_p, ((0, 0), (0, unit_p - UNIT)))

    nb = _cdiv(B, tb)

    if mode == "single":
        grid = (nb,)
        in_specs = [
            pl.BlockSpec((tb, in_p), lambda i: (i, 0)),        # x: streams
            pl.BlockSpec((in_p, unit_p), lambda i: (0, 0)),    # W: fetched once
            pl.BlockSpec((1, unit_p), lambda i: (0, 0)),       # bias: resident
        ]
        out_spec = pl.BlockSpec((tb, unit_p), lambda i: (i, 0))
        kernel = _me_single_kernel
        semantics = ("parallel",)
        w_reads = 1
    else:
        grid = (nb, nk)                                        # K innermost
        in_specs = [
            pl.BlockSpec((tb, tk), lambda i, k: (i, k)),
            pl.BlockSpec((tk, unit_p), lambda i, k: (k, 0)),
            pl.BlockSpec((1, unit_p), lambda i, k: (0, 0)),
        ]
        out_spec = pl.BlockSpec((tb, unit_p), lambda i, k: (i, 0))
        kernel = _me_ktiled_kernel
        semantics = ("parallel", "arbitrary")
        w_reads = nb                          # W is re-streamed per batch tile

    out = pl.pallas_call(
        kernel,
        out_shape=jax.ShapeDtypeStruct((B, unit_p), jnp.float32),
        grid_spec=pltpu.PrefetchScalarGridSpec(
            num_scalar_prefetch=0,
            grid=grid,
            in_specs=in_specs,
            out_specs=out_spec,
        ),
        compiler_params=pltpu.CompilerParams(
            dimension_semantics=semantics,
            vmem_limit_bytes=vmem_limit,
        ),
        cost_estimate=pl.CostEstimate(
            flops=2 * B * in_p * unit_p,
            transcendentals=B,
            bytes_accessed=(B * in_p * sb + w_reads * in_p * unit_p * sb
                            + B * unit_p * 4 + unit_p * 4),
        ),
    )(x_s, w_s, b_p)

    return out if unit_p == UNIT else out[:, :UNIT]


def metric_embedding(x, w_t, b, *, stream_dtype=jnp.bfloat16,
                     force_k_tiled=False, tk_max=2048):
    """x: (B, IN), w_t: (IN, UNIT), b: (UNIT,) -> (B, UNIT) f32, L2-normalized rows."""
    B, IN = x.shape
    UNIT = w_t.shape[1]
    sdt = np.dtype(stream_dtype)
    mode, tb, tk, nk, in_p, unit_p, vmem_limit = _plan(
        int(B), int(IN), int(UNIT), int(sdt.itemsize),
        bool(force_k_tiled), int(tk_max))
    return _metric_embedding_impl(
        x, w_t, b, stream_dtype=sdt, mode=mode, tb=tb, tk=tk, nk=nk,
        in_p=in_p, unit_p=unit_p, vmem_limit=vmem_limit)


def reference(x, w_t, b):
    y = x @ w_t + b
    n = jnp.maximum(jnp.sqrt(jnp.sum(y * y, axis=1, keepdims=True)), 1e-12)
    return y / n


if __name__ == "__main__":
    key = jax.random.PRNGKey(0)
    kx, kw, kb = jax.random.split(key, 3)

    # Small shapes consistent with Linear(in_features, unit); chosen so that the
    # ragged batch edge (B=20 with tb=16) and the UNIT 96->128 lane padding run.
    B, IN, UNIT = 20, 256, 96

    x = jax.random.normal(kx, (B, IN), dtype=jnp.float32)
    bound = 1.0 / (IN ** 0.5)  # mimics Linear's uniform(-1/sqrt(in), 1/sqrt(in))
    w = jax.random.uniform(kw, (UNIT, IN), dtype=jnp.float32,
                           minval=-bound, maxval=bound)
    b = jax.random.uniform(kb, (UNIT,), dtype=jnp.float32,
                           minval=-bound, maxval=bound)
    w_t = w.T  # (IN, UNIT): pre-transposed weight for x @ W^T

    ref = reference(x, w_t, b)

    # 1) Default path: single-pass grid (K collapsed), bf16 streaming.
    out_bf16 = jax.block_until_ready(metric_embedding(x, w_t, b))
    assert out_bf16.shape == (B, UNIT)
    assert jnp.allclose(out_bf16, ref, atol=2e-2, rtol=2e-2), "bf16 path mismatch"

    # 2) Exact f32 streaming, single-pass grid.
    out_f32 = jax.block_until_ready(
        metric_embedding(x, w_t, b, stream_dtype=jnp.float32))
    assert out_f32.shape == (B, UNIT)
    assert jnp.allclose(out_f32, ref, atol=1e-4, rtol=1e-4), "f32 path mismatch"

    # 3) K-tiled fallback path (forced at small shapes to exercise it).
    out_kt = jax.block_until_ready(
        metric_embedding(x, w_t, b, stream_dtype=jnp.float32,
                         force_k_tiled=True, tk_max=128))
    assert out_kt.shape == (B, UNIT)
    assert jnp.allclose(out_kt, ref, atol=1e-4, rtol=1e-4), "K-tiled path mismatch"

    print("KERNEL_OK")
</pallas_src>

<mosaic_0001>
module attributes {stable_mosaic.version = 11 : i64} {
  func.func @_me_single_kernel(%arg0: i32, %arg1: memref<16x256xbf16, #tpu.memory_space<vmem>>, %arg2: memref<256x128xbf16, #tpu.memory_space<vmem>>, %arg3: memref<1x128xf32, #tpu.memory_space<vmem>>, %arg4: memref<16x128xf32, #tpu.memory_space<vmem>>) attributes {dimension_semantics = [#tpu.dimension_semantics<parallel>], iteration_bounds = array<i64: 2>, scalar_prefetch = 0 : i64, scratch_operands = 0 : i64, tpu.core_type = #tpu.core_type<tc>, window_params = [{transform_indices = @transform_0, window_bounds = array<i64: 16, 256>}, {pipeline_mode = #tpu.pipeline_mode<synchronous>, transform_indices = @transform_1, window_bounds = array<i64: 256, 128>}, {pipeline_mode = #tpu.pipeline_mode<synchronous>, transform_indices = @transform_2, window_bounds = array<i64: 1, 128>}, {transform_indices = @transform_3, window_bounds = array<i64: 16, 128>}]} {
    %c0 = arith.constant 0 : index
    %c0_0 = arith.constant 0 : index
    %0 = vector.load %arg1[%c0, %c0_0] : memref<16x256xbf16, #tpu.memory_space<vmem>>, vector<16x256xbf16>
    %c0_1 = arith.constant 0 : index
    %c0_2 = arith.constant 0 : index
    %1 = vector.load %arg2[%c0_1, %c0_2] : memref<256x128xbf16, #tpu.memory_space<vmem>>, vector<256x128xbf16>
    %cst = arith.constant dense<0.000000e+00> : vector<16x128xf32>
    %2 = tpu.matmul %0, %1, %cst {dimension_numbers = #tpu.dot_dimension_numbers<[1], [0], [0], [1], [0, 0, 1, 1], [], []>} : vector<16x256xbf16>, vector<256x128xbf16>, vector<16x128xf32> -> vector<16x128xf32>
    %c0_3 = arith.constant 0 : index
    %c0_4 = arith.constant 0 : index
    %3 = vector.load %arg3[%c0_3, %c0_4] : memref<1x128xf32, #tpu.memory_space<vmem>>, vector<1x128xf32>
    %4 = vector.broadcast %3 : vector<1x128xf32> to vector<16x128xf32>
    %5 = arith.addf %2, %4 : vector<16x128xf32>
    %6 = arith.mulf %5, %5 : vector<16x128xf32>
    %cst_5 = arith.constant dense<0.000000e+00> : vector<16xf32>
    %7 = vector.multi_reduction <add>, %6, %cst_5 [1] : vector<16x128xf32> to vector<16xf32>
    %8 = vector.shape_cast %7 : vector<16xf32> to vector<16x1xf32>
    %cst_6 = arith.constant 1.000000e-24 : f32
    %9 = vector.broadcast %cst_6 : f32 to vector<16x1xf32>
    %10 = arith.maximumf %8, %9 : vector<16x1xf32>
    %11 = math.rsqrt %10 : vector<16x1xf32>
    %12 = vector.broadcast %11 : vector<16x1xf32> to vector<16x128xf32>
    %13 = arith.mulf %5, %12 : vector<16x128xf32>
    %c0_7 = arith.constant 0 : index
    %c0_8 = arith.constant 0 : index
    %14 = vector.load %arg4[%c0_7, %c0_8] : memref<16x128xf32, #tpu.memory_space<vmem>>, vector<16x128xf32>
    tpu.vector_store %arg4[%c0_7, %c0_8], %13 {strides = array<i32>} : memref<16x128xf32, #tpu.memory_space<vmem>>, vector<16x128xf32>,
    return
  }
  func.func @transform_0(%arg0: i32) -> (i32, i32) {
    %c0_i32 = arith.constant 0 : i32
    %c0_i32_0 = arith.constant 0 : i32
    return %arg0, %c0_i32 : i32, i32
  }
  func.func @transform_1(%arg0: i32) -> (i32, i32) {
    %c0_i32 = arith.constant 0 : i32
    %c0_i32_0 = arith.constant 0 : i32
    %c0_i32_1 = arith.constant 0 : i32
    return %c0_i32, %c0_i32_0 : i32, i32
  }
  func.func @transform_2(%arg0: i32) -> (i32, i32) {
    %c0_i32 = arith.constant 0 : i32
    %c0_i32_0 = arith.constant 0 : i32
    %c0_i32_1 = arith.constant 0 : i32
    return %c0_i32, %c0_i32_0 : i32, i32
  }
  func.func @transform_3(%arg0: i32) -> (i32, i32) {
    %c0_i32 = arith.constant 0 : i32
    %c0_i32_0 = arith.constant 0 : i32
    return %arg0, %c0_i32 : i32, i32
  }
}

</mosaic_0001>

<llo_original>
// kernel: _metric_embedding_impl.1
$region0: #{_metric_embedding_impl.1}
  #allocation0 [shape = 'u32[]', space=smem, size = 0x4, offset = 0x4, fixed_abs, tag = 'smem constant byte address 0x4 - core index']
  #allocation1 [shape = 'u32[144,128]{1,0:T(1,128)}', space=vmem, size = 0x12000, scoped, tag = 'internal scratch']
  %s0 = inlined_call_operand.vmem [shape: bf16[20,256], index: 0, kind: input, shape index: {}]
  %s1 = inlined_call_operand.vmem [shape: bf16[256,128], index: 1, kind: input, shape index: {}]
  %s2 = inlined_call_operand.vmem [shape: f32[1,128], index: 2, kind: input, shape index: {}]
  %s3 = inlined_call_operand.hbm [shape: f32[20,128], index: 3, kind: output, shape index: {}]
  %s4 = sld [smem:[#allocation0]]
  $region45: #{_metric_embedding_impl.1} parent=0
    _
  %s6 = ssub.s32 1, %s4
  %s7 = scalar_select 0, %s6, %s4
  $region1: #{_metric_embedding_impl.1} parent=0
    #allocation2 [shape = 'u8[16384]{0}', space=vmem, size = 0x4000, scoped, tag = 'output window, operand 0']
    #allocation3 [shape = 's32[2]{0}', space=sflag, size = 0x8, scoped, tag = 'scoped memory for _metric_embedding_impl.1']
    %8 = vsyncpa [#allocation3], 0
    %s9 = scalar_lea.sflag [#allocation3], 1
    %10 = vsyncpa %s9, 0
    loop: start=0, step=1, limit=4
    $region2: #{_metric_embedding_impl.1} parent=1 // loop_pre_header
      _
    $region3: #{_metric_embedding_impl.1} parent=1 // loop_header
      %s12 = sphi 0, %s16
      %p13 = scmp.ge.s32.totalorder %s12, 4
      %s22 = sphi 0, %s24
      %s25 = sphi 0, %s22
      %s26 = sphi 0, %s25
      %s42 = sphi 0, %s26
      %s46 = sphi 0, %s46
      %s48 = sphi 0, %s46
      %s49 = sphi 0, %s48
      %s63 = sphi 0, %s49
      %s67 = sphi 0, %s67
      %s69 = sphi 0, %s67
      %s70 = sphi 0, %s69
      %s84 = sphi 0, %s70
      %s90 = sphi 0, %s92
      %s93 = sphi 0, %s90
      %s94 = sphi 0, %s93
      %s110 = sphi 0, %s94
    $region4: #{_metric_embedding_impl.1} parent=1 // loop_header_branch
      %15 = sbr.rel (%p13) target = $region8
    $region5: #{_metric_embedding_impl.1} parent=1 // loop_body
      %s17 = ssub.s32 %s12, 1
      %s18 = ssub.s32 %s12, 2
      %s19 = sadd.s32 %s12, 1
      %s20 = ssub.s32 %s12, %s19
      %p21 = scmp.eq.s32.totalorder %s20, 0
      %s23 = sadd.s32 %s22, 1
      %s24 = scalar_select %p21, %s22, %s23
      %p27 = pneg %p21
      %p28 = scmp.eq.s32.totalorder %s12, 1
      %p29 = por %p27, %p28
      %p30 = scmp.ne.s32.totalorder %s22, %s25
      %p31 = scmp.eq.s32.totalorder %s12, 0
      %p32 = por %p30, %p31
      %p33 = scmp.ne.s32.totalorder %s22, %s25
      %p34 = scmp.eq.s32.totalorder %s17, 1
      %p35 = por %p33, %p34
      %p36 = scmp.ne.s32.totalorder %s25, %s26
      %p37 = scmp.eq.s32.totalorder %s17, 0
      %p38 = por %p36, %p37
      %p39 = scmp.ne.s32.totalorder %s25, %s26
      %p40 = scmp.eq.s32.totalorder %s18, 1
      %p41 = por %p39, %p40
      %p43 = scmp.ne.s32.totalorder %s26, %s42
      %p44 = scmp.eq.s32.totalorder %s18, 0
      %p45 = por %p43, %p44
      %s47 = sadd.s32 %s46, 1
      %p50 = scmp.eq.s32.totalorder %s12, 1
      %p51 = scmp.ne.s32.totalorder %s46, %s48
      %p52 = scmp.eq.s32.totalorder %s12, 0
      %p53 = por %p51, %p52
      %p54 = scmp.ne.s32.totalorder %s46, %s48
      %p55 = scmp.eq.s32.totalorder %s17, 1
      %p56 = por %p54, %p55
      %p57 = scmp.ne.s32.totalorder %s48, %s49
      %p58 = scmp.eq.s32.totalorder %s17, 0
      %p59 = por %p57, %p58
      %p60 = scmp.ne.s32.totalorder %s48, %s49
      %p61 = scmp.eq.s32.totalorder %s18, 1
      %p62 = por %p60, %p61
      %p64 = scmp.ne.s32.totalorder %s49, %s63
      %p65 = scmp.eq.s32.totalorder %s18, 0
      %p66 = por %p64, %p65
      %s68 = sadd.s32 %s67, 1
      %p71 = scmp.eq.s32.totalorder %s12, 1
      %p72 = scmp.ne.s32.totalorder %s67, %s69
      %p73 = scmp.eq.s32.totalorder %s12, 0
      %p74 = por %p72, %p73
      %p75 = scmp.ne.s32.totalorder %s67, %s69
      %p76 = scmp.eq.s32.totalorder %s17, 1
      %p77 = por %p75, %p76
      %p78 = scmp.ne.s32.totalorder %s69, %s70
      %p79 = scmp.eq.s32.totalorder %s17, 0
      %p80 = por %p78, %p79
      %p81 = scmp.ne.s32.totalorder %s69, %s70
      %p82 = scmp.eq.s32.totalorder %s18, 1
      %p83 = por %p81, %p82
      %p85 = scmp.ne.s32.totalorder %s70, %s84
      %p86 = scmp.eq.s32.totalorder %s18, 0
      %p87 = por %p85, %p86
      %s88 = ssub.s32 %s12, %s19
      %p89 = scmp.eq.s32.totalorder %s88, 0
      %s91 = sadd.s32 %s90, 1
      %s92 = scalar_select %p89, %s90, %s91
      %p95 = pneg %p89
      %p96 = scmp.eq.s32.totalorder %s12, 1
      %p97 = por %p95, %p96
      %p98 = scmp.ne.s32.totalorder %s90, %s93
      %p99 = scmp.eq.s32.totalorder %s12, 0
      %p100 = por %p98, %p99
      %p101 = scmp.ne.s32.totalorder %s90, %s93
      %p102 = scmp.eq.s32.totalorder %s17, 1
      %p103 = por %p101, %p102
      %p104 = scmp.ne.s32.totalorder %s93, %s94
      %p105 = scmp.eq.s32.totalorder %s17, 0
      %p106 = por %p104, %p105
      %p107 = scmp.ne.s32.totalorder %s93, %s94
      %p108 = scmp.eq.s32.totalorder %s18, 1
      %p109 = por %p107, %p108
      %p111 = scmp.ne.s32.totalorder %s94, %s110
      %p112 = scmp.eq.s32.totalorder %s18, 0
      %p113 = por %p111, %p112
      %p114 = scmp.le.s32.totalorder 1, %s12
      %p115 = scmp.lt.s32.totalorder %s12, 3
      %p116 = pnand %p114, %p115
      %p117 = pneg %p116
      // Predicated region
      $region9: #{_metric_embedding_impl.1} parent=5 // pred_check
        _
      $region10: #{_metric_embedding_impl.1} parent=5 // pred_check_branch
        %119 = sbr.rel (%p116) target = $region12
      $region11: #{_metric_embedding_impl.1} parent=5 // pred_region
        %s120 = ssub.s32 %s12, 1
        // Predicated region
        $region13: #{_metric_embedding_impl.1} parent=11 // pred_check
          %p121 = pneg %p59
        $region14: #{_metric_embedding_impl.1} parent=11 // pred_check_branch
          %123 = sbr.rel (%p121) target = $region16
        $region15: #{_metric_embedding_impl.1} parent=11 // pred_region
          _
        $region16: #{_metric_embedding_impl.1} parent=11 // pred_fallthru
          _
        // Predicated region
        $region17: #{_metric_embedding_impl.1} parent=11 // pred_check
          %p124 = pneg %p80
        $region18: #{_metric_embedding_impl.1} parent=11 // pred_check_branch
          %126 = sbr.rel (%p124) target = $region20
        $region19: #{_metric_embedding_impl.1} parent=11 // pred_region
          _
        $region20: #{_metric_embedding_impl.1} parent=11 // pred_fallthru
          _
      $region12: #{_metric_embedding_impl.1} parent=5 // pred_fallthru
        _
      %p127 = scmp.lt.s32.totalorder %s12, 2
      // Predicated region
      $region21: #{_metric_embedding_impl.1} parent=5 // pred_check
        %p128 = pneg %p127
      $region22: #{_metric_embedding_impl.1} parent=5 // pred_check_branch
        %130 = sbr.rel (%p128) target = $region24
      $region23: #{_metric_embedding_impl.1} parent=5 // pred_region
        // Predicated region
        $region25: #{_metric_embedding_impl.1} parent=23 // pred_check
          %p131 = pneg %p32
        $region26: #{_metric_embedding_impl.1} parent=23 // pred_check_branch
          %133 = sbr.rel (%p131) target = $region28
        $region27: #{_metric_embedding_impl.1} parent=23 // pred_region
          %s134 = smul.u32 2, %s12
          %s135 = ssub.s32 3, %s134
          %p136 = scmp.lt.s32.totalorder %s135, 2
          %s137 = scalar_select %p136, %s135, 2
          %s138 = smul.u32 64, %s137
          %s139 = smul.u32 %s138, 2
          %p140 = scmp.lt.s32.totalorder %s134, 2
          %s141 = scalar_select %p140, %s134, 2
          %s142 = smul.addr %s141, 2
          %s143 = smul.addr %s142, 4
          %s144 = scalar_lea.vmem %s0, %s143
          %s145 = smul.u32 2, %s12
          %s146 = ssub.s32 3, %s145
          %p147 = scmp.lt.s32.totalorder %s146, 2
          %s148 = scalar_select %p147, %s146, 2
          %s149 = smul.u32 64, %s148
          %s150 = smul.u32 %s149, 2
        $region28: #{_metric_embedding_impl.1} parent=23 // pred_fallthru
          _
      $region24: #{_metric_embedding_impl.1} parent=5 // pred_fallthru
        _
      %p151 = scmp.le.s32.totalorder 1, %s12
      %p152 = scmp.lt.s32.totalorder %s12, 3
      %p153 = pnand %p151, %p152
      %p154 = pneg %p153
      // Predicated region
      $region29: #{_metric_embedding_impl.1} parent=5 // pred_check
        _
      $region30: #{_metric_embedding_impl.1} parent=5 // pred_check_branch
        %156 = sbr.rel (%p153) target = $region32
      $region31: #{_metric_embedding_impl.1} parent=5 // pred_region
        %s157 = ssub.s32 %s12, 1
        %s158 = smul.u32 2, %s17
        %s159 = ssub.s32 3, %s158
        %p160 = scmp.lt.s32.totalorder %s159, 2
        %s161 = scalar_select %p160, %s159, 2
        %s162 = smul.u32 64, %s161
        %s163 = smul.u32 %s162, 2
        %p164 = scmp.lt.s32.totalorder %s158, 2
        %s165 = scalar_select %p164, %s158, 2
        %s166 = smul.addr %s165, 2
        %s167 = smul.addr %s166, 4
        %s168 = scalar_lea.vmem %s0, %s167
        %p169 = pneg %p38
        %p170 = pneg %p35
        %p171 = pneg %p59
        %p172 = pneg %p56
        %p173 = pneg %p80
        %p174 = pneg %p77
        %p175 = pneg %p106
        %p176 = pneg %p103
        %s177 = sand.u32 %s93, 1
        %s178 = scalar_lea.sflag [#allocation3], %s177
        %s179 = sand.u32 %s93, 1
        %s180 = smul.addr %s179, 16
        %s181 = scalar_lea.vmem [#allocation2], %s180
        %s182 = smul.u32 2, %s17
        %s183 = ssub.s32 3, %s182
        %p184 = scmp.lt.s32.totalorder %s183, 2
        %s185 = scalar_select %p184, %s183, 2
        %s186 = smul.u32 64, %s185
        %s187 = smul.u32 %s186, 2
        %p188 = scmp.lt.s32.totalorder %s182, 2
        %s189 = scalar_select %p188, %s182, 2
        %s190 = smul.addr %s189, 2
        %s191 = smul.addr %s190, 4
        %s192 = scalar_lea.vmem %s0, %s191
        %s193 = smul.u32 2, %s17
        %s194 = ssub.s32 3, %s193
        %p195 = scmp.lt.s32.totalorder %s194, 2
        %s196 = scalar_select %p195, %s194, 2
        %s197 = smul.u32 64, %s196
        %s198 = smul.u32 %s197, 2
        %s199 = smul.u32 2, %s17
        %s200 = ssub.s32 3, %s199
        %p201 = scmp.lt.s32.totalorder %s200, 2
        %s202 = scalar_select %p201, %s200, 2
        %s203 = smul.u32 128, %s202
        %v205 = vld [vmem:[%s192] sm:$0xff]
        %v206 = vld [vmem:[%s192 + $0x8] sm:$0xff]
        %v207 = vld [vmem:[%s1] sm:$0xf]
        %v208 = vld [vmem:[%s1 + $0x4] sm:$0xf]
        %v209 = vld [vmem:[%s1 + $0x8] sm:$0xf]
        %v210 = vld [vmem:[%s1 + $0xc] sm:$0xf]
        %v211 = vld [vmem:[%s1 + $0x10] sm:$0xf]
        %v212 = vld [vmem:[%s1 + $0x14] sm:$0xf]
        %v213 = vld [vmem:[%s1 + $0x18] sm:$0xf]
        %v214 = vld [vmem:[%s1 + $0x1c] sm:$0xf]
        %v215 = vld [vmem:[%s1 + $0x20] sm:$0xf]
        %v216 = vld [vmem:[%s1 + $0x24] sm:$0xf]
        %v217 = vld [vmem:[%s1 + $0x28] sm:$0xf]
        %v218 = vld [vmem:[%s1 + $0x2c] sm:$0xf]
        %v219 = vld [vmem:[%s1 + $0x30] sm:$0xf]
        %v220 = vld [vmem:[%s1 + $0x34] sm:$0xf]
        %v221 = vld [vmem:[%s1 + $0x38] sm:$0xf]
        %v222 = vld [vmem:[%s1 + $0x3c] sm:$0xf]
        %v223 = vld [vmem:[%s1 + $0x40] sm:$0xf]
        %v224 = vld [vmem:[%s1 + $0x44] sm:$0xf]
        %v225 = vld [vmem:[%s1 + $0x48] sm:$0xf]
        %v226 = vld [vmem:[%s1 + $0x4c] sm:$0xf]
        %v227 = vld [vmem:[%s1 + $0x50] sm:$0xf]
        %v228 = vld [vmem:[%s1 + $0x54] sm:$0xf]
        %v229 = vld [vmem:[%s1 + $0x58] sm:$0xf]
        %v230 = vld [vmem:[%s1 + $0x5c] sm:$0xf]
        %v231 = vld [vmem:[%s1 + $0x60] sm:$0xf]
        %v232 = vld [vmem:[%s1 + $0x64] sm:$0xf]
        %v233 = vld [vmem:[%s1 + $0x68] sm:$0xf]
        %v234 = vld [vmem:[%s1 + $0x6c] sm:$0xf]
        %v235 = vld [vmem:[%s1 + $0x70] sm:$0xf]
        %v236 = vld [vmem:[%s1 + $0x74] sm:$0xf]
        %v237 = vld [vmem:[%s1 + $0x78] sm:$0xf]
        %v238 = vld [vmem:[%s1 + $0x7c] sm:$0xf]
        %v239 = vld [vmem:[%s2] sm:$0x1]
        %v241 = vlaneseq
        %v242 = vshrl.u32 %v241, 7
        %v243 = vsub.s32 0, %v242
        %v244 = vrot.slane %v239, %v243
        %v248 = vunpack.c.l.b16 %v205
        %v249 = vunpack.c.h.b16 %v205
        %v250 = vunpack.c.l.b16 %v206
        %v251 = vunpack.c.h.b16 %v206
        %v252 = vpack.c.b16 %v250, %v248
        %v253 = vpack.c.b16 %v251, %v249
        %v288 = vunpack.c.l.b16 %v207
        %v289 = vunpack.c.l.b16 %v208
        %v290 = vunpack.c.l.b16 %v209
        %v291 = vunpack.c.l.b16 %v210
        %v292 = vunpack.c.l.b16 %v211
        %v293 = vunpack.c.l.b16 %v212
        %v294 = vunpack.c.l.b16 %v213
        %v295 = vunpack.c.l.b16 %v214
        %v296 = vunpack.c.l.b16 %v215
        %v297 = vunpack.c.l.b16 %v216
        %v298 = vunpack.c.l.b16 %v217
        %v299 = vunpack.c.l.b16 %v218
        %v300 = vunpack.c.l.b16 %v219
        %v301 = vunpack.c.l.b16 %v220
        %v302 = vunpack.c.l.b16 %v221
        %v303 = vunpack.c.l.b16 %v222
        %v304 = vunpack.c.l.b16 %v223
        %v305 = vunpack.c.l.b16 %v224
        %v306 = vunpack.c.l.b16 %v225
        %v307 = vunpack.c.l.b16 %v226
        %v308 = vunpack.c.l.b16 %v227
        %v309 = vunpack.c.l.b16 %v228
        %v310 = vunpack.c.l.b16 %v229
        %v311 = vunpack.c.l.b16 %v230
        %v312 = vunpack.c.l.b16 %v231
        %v313 = vunpack.c.l.b16 %v232
        %v314 = vunpack.c.l.b16 %v233
        %v315 = vunpack.c.l.b16 %v234
        %v316 = vunpack.c.l.b16 %v235
        %v317 = vunpack.c.l.b16 %v236
        %v318 = vunpack.c.l.b16 %v237
        %v319 = vunpack.c.l.b16 %v238
        %v320 = vpack.c.b16 %v289, %v288
        %v321 = vpack.c.b16 %v291, %v290
        %v322 = vpack.c.b16 %v293, %v292
        %v323 = vpack.c.b16 %v295, %v294
        %v324 = vpack.c.b16 %v297, %v296
        %v325 = vpack.c.b16 %v299, %v298
        %v326 = vpack.c.b16 %v301, %v300
        %v327 = vpack.c.b16 %v303, %v302
        %v328 = vpack.c.b16 %v305, %v304
        %v329 = vpack.c.b16 %v307, %v306
        %v330 = vpack.c.b16 %v309, %v308
        %v331 = vpack.c.b16 %v311, %v310
        %v332 = vpack.c.b16 %v313, %v312
        %v333 = vpack.c.b16 %v315, %v314
        %v334 = vpack.c.b16 %v317, %v316
        %v335 = vpack.c.b16 %v319, %v318
        %352 = vmatprep.subr.bf16.mxu0 0
        %353 = vmatpush1.bf16.msra.mxu0 %v320
        %354 = vmatprep.subr.bf16.mxu0 0
        %355 = vmatpush1.bf16.msra.mxu0 %v321
        %356 = vmatprep.subr.bf16.mxu0 0
        %357 = vmatpush1.bf16.msra.mxu0 %v322
        %358 = vmatprep.subr.bf16.mxu0 0
        %359 = vmatpush1.bf16.msra.mxu0 %v323
        %360 = vmatprep.subr.bf16.mxu0 0
        %361 = vmatpush1.bf16.msra.mxu0 %v324
        %362 = vmatprep.subr.bf16.mxu0 0
        %363 = vmatpush1.bf16.msra.mxu0 %v325
        %364 = vmatprep.subr.bf16.mxu0 0
        %365 = vmatpush1.bf16.msra.mxu0 %v326
        %366 = vmatprep.subr.bf16.mxu0 0
        %367 = vmatpush1.bf16.msra.mxu0 %v327
        %368 = vmatprep.subr.bf16.mxu0 0
        %369 = vmatpush1.bf16.msra.mxu0 %v328
        %370 = vmatprep.subr.bf16.mxu0 0
        %371 = vmatpush1.bf16.msra.mxu0 %v329
        %372 = vmatprep.subr.bf16.mxu0 0
        %373 = vmatpush1.bf16.msra.mxu0 %v330
        %374 = vmatprep.subr.bf16.mxu0 0
        %375 = vmatpush1.bf16.msra.mxu0 %v331
        %376 = vmatprep.subr.bf16.mxu0 0
        %377 = vmatpush1.bf16.msra.mxu0 %v332
        %378 = vmatprep.subr.bf16.mxu0 0
        %379 = vmatpush1.bf16.msra.mxu0 %v333
        %380 = vmatprep.subr.bf16.mxu0 0
        %381 = vmatpush1.bf16.msra.mxu0 %v334
        %382 = vmatprep.subr.bf16.mxu0 0
        %383 = vmatpush1.bf16.msra.mxu0 %v335
        %384 = vmatprep.mubr.bf16.mxu0 %v253
        %385 = vmatmul.mubr.bf16.gmra.mrb[0].mxu0 %v252
        %v386 = vpop.f32.mrb[0].mxu0
        %v387 = vadd.f32 %v244, %v386
        %v388 = vpop.f32.mrb[0].mxu0
        %v389 = vpop.f32.mrb[0].mxu0
        %v390 = vadd.f32 %v244, %v389
        %v391 = vpop.f32.mrb[0].mxu0
        %392 = vdwg.mxu0
        %v393 = vmul.f32 %v387, %v387
        %v394 = vmul.f32 %v390, %v390
        %395 = vadd.xlane.f32.xlu0 %v393
        %v396 = vpop.xlane.xlu0 %395
        %397 = vadd.xlane.f32.xlu0 %v394
        %v398 = vpop.xlane.xlu0 %397
        %v399 = vmax.f32 %v396, 1e-24
        %v400 = vmax.f32 %v398, 1e-24
        %v401 = vrsqrt.pop %v399
        %v402 = vrsqrt.pop %v400
        %v403 = vmul.f32 %v387, %v401
        %v404 = vmul.f32 %v390, %v402
        %405 = vst [vmem:[%s181] sm:$0xff] %v403
        %406 = vst [vmem:[%s181 + $0x8] sm:$0xff] %v404
        %s407 = sand.u32 %s93, 1
        %s408 = scalar_lea.sflag [#allocation3], %s407
        %s409 = sand.u32 %s93, 1
        %s410 = smul.addr %s409, 16
        %s411 = scalar_lea.vmem [#allocation2], %s410
        // Predicated region
        $region33: #{_metric_embedding_impl.1} parent=31 // pred_check
          %p412 = pneg %p103
        $region34: #{_metric_embedding_impl.1} parent=31 // pred_check_branch
          %414 = sbr.rel (%p412) target = $region36
        $region35: #{_metric_embedding_impl.1} parent=31 // pred_region
          %s415 = smul.u32 2, %s17
          %s416 = ssub.s32 3, %s415
          %p417 = scmp.lt.s32.totalorder %s416, 2
          %s418 = scalar_select %p417, %s416, 2
          %s419 = smul.u32 128, %s418
          %s421 = ssub.s32 256, %s419
          %422 = vsyncadd %s408, %s421
          %p423 = scmp.ne.s32.totalorder 0, %s419
          %s424 = smul.addr %s415, 128
          %s425 = scalar_lea.hbm %s3, %s424
          %s426 = smul.u32 8, %s418
          %s427 = sshll.u32 %s411, 4
          %s428 = int_to_ptr.vmem [resolvable:$true] %s427
          %s429 = sshll.u32 %s426, 4
          %433 = dma.vmem_to_hbm [thread:$0]  (%p423), %s428, %s429, %s425, %s408, 128, 128, 8
        $region36: #{_metric_embedding_impl.1} parent=31 // pred_fallthru
          _
      $region32: #{_metric_embedding_impl.1} parent=5 // pred_fallthru
        _
      %p434 = scmp.le.s32.totalorder 2, %s12
      // Predicated region
      $region37: #{_metric_embedding_impl.1} parent=5 // pred_check
        %p435 = pneg %p434
      $region38: #{_metric_embedding_impl.1} parent=5 // pred_check_branch
        %437 = sbr.rel (%p435) target = $region40
      $region39: #{_metric_embedding_impl.1} parent=5 // pred_region
        %s438 = ssub.s32 %s12, 2
        // Predicated region
        $region41: #{_metric_embedding_impl.1} parent=39 // pred_check
          %p439 = pneg %p109
        $region42: #{_metric_embedding_impl.1} parent=39 // pred_check_branch
          %441 = sbr.rel (%p439) target = $region44
        $region43: #{_metric_embedding_impl.1} parent=39 // pred_region
          %s442 = sand.u32 %s94, 1
          %s443 = scalar_lea.sflag [#allocation3], %s442
          %s444 = sand.u32 %s94, 1
          %s445 = smul.addr %s444, 16
          %s446 = scalar_lea.vmem [#allocation2], %s445
          %447 = dma.done %s443, 256
        $region44: #{_metric_embedding_impl.1} parent=39 // pred_fallthru
          _
      $region40: #{_metric_embedding_impl.1} parent=5 // pred_fallthru
        _
    $region6: #{_metric_embedding_impl.1} parent=1 // loop_footer
      %s16 = sadd.s32 1, %s12
    $region7: #{_metric_embedding_impl.1} parent=1 // loop_footer_branch
      %11 = sbr.rel target = $region3
    $region8: #{_metric_embedding_impl.1} parent=1 // loop_exit
      _
    %448 = vsyncpa [#allocation3], 1
    %s449 = scalar_lea.sflag [#allocation3], 1
    %450 = vsyncpa %s449, 1

</llo_original>
